<compile_context>
chip_gen: v7x
topology: tpu7x:2x2x1
jax: 0.10.0
libtpu: 0.0.40
codegen_flags: <defaults>
</compile_context>

<pallas_src>
import jax
import jax.numpy as jnp
from jax.experimental import pallas as pl
from jax.experimental.pallas import tpu as pltpu


def _round_up(x, m):
    return (x + m - 1) // m * m


# --------------------- resident-weights kernel ------------------------------
def _mlp_kernel_resident(x_ref, w1_ref, w2_ref, o_ref):
    h = jnp.dot(x_ref[...], w1_ref[...], preferred_element_type=jnp.float32)
    h = jnp.maximum(h, 0.0)
    h = h * h                                    # relu(.)^2 in f32
    out = jnp.dot(h.astype(w2_ref.dtype), w2_ref[...],
                  preferred_element_type=jnp.float32)
    o_ref[...] = out.astype(o_ref.dtype)


# --------------------- hidden-split (accumulator) kernel --------------------
def _mlp_kernel_hsplit(x_ref, w1_ref, w2_ref, o_ref, acc_ref):
    @pl.when(pl.program_id(1) == 0)
    def _():
        acc_ref[...] = jnp.zeros_like(acc_ref)

    h = jnp.dot(x_ref[...], w1_ref[...], preferred_element_type=jnp.float32)
    h = jnp.maximum(h, 0.0)
    h = h * h
    acc_ref[...] += jnp.dot(h.astype(w2_ref.dtype), w2_ref[...],
                            preferred_element_type=jnp.float32)

    @pl.when(pl.program_id(1) == pl.num_programs(1) - 1)
    def _():
        o_ref[...] = acc_ref[...].astype(o_ref.dtype)


def mlp_pallas(x, w1_t, w2_t, *, tm=256, th=512,
               compute_dtype=jnp.bfloat16, force_hsplit=False):
    """x: (B, S, D); w1_t: (D, 4D) = fc_1.weight.T; w2_t: (4D, D) = fc_2.weight.T."""
    B, S, D = x.shape
    H = w1_t.shape[1]
    assert w1_t.shape == (D, H) and w2_t.shape == (H, D)

    N = B * S
    out_dtype = x.dtype
    itemsize = jnp.dtype(compute_dtype).itemsize

    # ---- tile / padding geometry ----
    TM = min(tm, _round_up(N, 8))
    N_pad = _round_up(N, TM)
    D_pad = _round_up(D, 128)

    # Keep weights fully VMEM-resident only when their (double-buffered) bf16
    # footprint fits comfortably on-chip; otherwise split the hidden dim.
    try:
        vmem_cap = int(pltpu.get_tpu_info().vmem_capacity_bytes)
    except Exception:
        vmem_cap = 64 << 20  # conservative (v7x)
    weight_bytes = 2 * D * H * itemsize
    use_hsplit = force_hsplit or (weight_bytes > vmem_cap // 4)

    if use_hsplit:
        TH = min(th, _round_up(H, 128))
        H_pad = _round_up(H, TH)
    else:
        TH = None
        H_pad = _round_up(H, 128)

    # ---- pad + cast operands (zero padding is exact for this MLP) ----
    x2d = x.reshape(N, D)
    if (N_pad, D_pad) != (N, D):
        x2d = jnp.pad(x2d, ((0, N_pad - N), (0, D_pad - D)))
    if (D_pad, H_pad) != (D, H):
        w1_t = jnp.pad(w1_t, ((0, D_pad - D), (0, H_pad - H)))
        w2_t = jnp.pad(w2_t, ((0, H_pad - H), (0, D_pad - D)))
    x2d = x2d.astype(compute_dtype)
    w1p = w1_t.astype(compute_dtype)
    w2p = w2_t.astype(compute_dtype)

    out_bytes = N_pad * D_pad * jnp.dtype(out_dtype).itemsize
    cost = pl.CostEstimate(
        flops=4 * N_pad * D_pad * H_pad,  # two (N x D x H) matmuls
        transcendentals=0,
        bytes_accessed=(x2d.size + w1p.size + w2p.size) * itemsize + out_bytes,
    )

    if not use_hsplit:
        # x/out tiles double-buffered + resident weights (x2 buffers) + f32 h tile.
        vmem_need = (2 * TM * D_pad * itemsize
                     + 2 * TM * D_pad * jnp.dtype(out_dtype).itemsize
                     + 2 * 2 * D_pad * H_pad * itemsize
                     + TM * H_pad * 4)
        vmem_limit = int(min(max(vmem_need + (8 << 20), 32 << 20), 48 << 20))
        out2d = pl.pallas_call(
            _mlp_kernel_resident,
            out_shape=jax.ShapeDtypeStruct((N_pad, D_pad), out_dtype),
            grid=(N_pad // TM,),
            in_specs=[
                pl.BlockSpec((TM, D_pad), lambda i: (i, 0)),
                pl.BlockSpec((D_pad, H_pad), lambda i: (0, 0)),
                pl.BlockSpec((H_pad, D_pad), lambda i: (0, 0)),
            ],
            out_specs=pl.BlockSpec((TM, D_pad), lambda i: (i, 0)),
            compiler_params=pltpu.CompilerParams(
                dimension_semantics=("parallel",),
                vmem_limit_bytes=vmem_limit),
            cost_estimate=cost,
        )(x2d, w1p, w2p)
    else:
        vmem_need = (2 * TM * D_pad * itemsize
                     + 2 * TM * D_pad * jnp.dtype(out_dtype).itemsize
                     + 2 * 2 * D_pad * TH * itemsize
                     + TM * TH * 4
                     + TM * D_pad * 4)
        vmem_limit = int(min(max(vmem_need + (8 << 20), 32 << 20), 48 << 20))
        out2d = pl.pallas_call(
            _mlp_kernel_hsplit,
            out_shape=jax.ShapeDtypeStruct((N_pad, D_pad), out_dtype),
            grid=(N_pad // TM, H_pad // TH),
            in_specs=[
                pl.BlockSpec((TM, D_pad), lambda i, h: (i, 0)),
                pl.BlockSpec((D_pad, TH), lambda i, h: (0, h)),
                pl.BlockSpec((TH, D_pad), lambda i, h: (h, 0)),
            ],
            out_specs=pl.BlockSpec((TM, D_pad), lambda i, h: (i, 0)),
            scratch_shapes=[pltpu.VMEM((TM, D_pad), jnp.float32)],
            compiler_params=pltpu.CompilerParams(
                dimension_semantics=("parallel", "arbitrary"),
                vmem_limit_bytes=vmem_limit),
            cost_estimate=cost,
        )(x2d, w1p, w2p)

    return out2d[:N, :D].reshape(B, S, D)


def mlp_reference(x, w1_t, w2_t):
    h = jnp.dot(x, w1_t)
    h = jnp.square(jnp.maximum(h, 0.0))
    return jnp.dot(h, w2_t)


if __name__ == "__main__":
    # Small shapes consistent with the module: batch=2, seq=8, embed_dim=32.
    B, S, D = 2, 8, 32
    H = 4 * D  # 128

    key = jax.random.PRNGKey(0)
    kx, kw1, kw2 = jax.random.split(key, 3)

    x = jax.random.normal(kx, (B, S, D), dtype=jnp.float32)
    # fc_1.weight is (4D, D) in PyTorch; pass its transpose (D, 4D).
    w1 = jax.random.normal(kw1, (H, D), dtype=jnp.float32) / jnp.sqrt(D)
    # NOTE: the PyTorch module zero-inits fc_2.weight; here we use a random w2
    # so the numerical check actually exercises relu^2 + the second matmul.
    w2 = jax.random.normal(kw2, (D, H), dtype=jnp.float32) / jnp.sqrt(H)

    w1_t = w1.T  # (D, 4D)
    w2_t = w2.T  # (4D, D)

    # Reference computed on bf16-rounded operands (the kernel runs the MXU in
    # bf16 with f32 accumulation), so the tolerance below is meaningful.
    x_r = x.astype(jnp.bfloat16).astype(jnp.float32)
    w1_r = w1_t.astype(jnp.bfloat16).astype(jnp.float32)
    w2_r = w2_t.astype(jnp.bfloat16).astype(jnp.float32)
    ref = mlp_reference(x_r, w1_r, w2_r)

    # Path 1: resident-weights kernel (what small D selects automatically).
    out = mlp_pallas(x, w1_t, w2_t)
    jax.block_until_ready(out)
    assert out.shape == (B, S, D)
    assert jnp.allclose(out, ref, atol=2e-2, rtol=2e-2), float(
        jnp.max(jnp.abs(out - ref)))

    # Path 2: hidden-split accumulator kernel (used for large D / small VMEM).
    out_hs = mlp_pallas(x, w1_t, w2_t, force_hsplit=True)
    jax.block_until_ready(out_hs)
    assert jnp.allclose(out_hs, ref, atol=2e-2, rtol=2e-2)

    # Faithful-to-module init: fc_2.weight zero-initialized -> output is zero.
    out_zero = mlp_pallas(x, w1_t, jnp.zeros((H, D), jnp.float32))
    jax.block_until_ready(out_zero)
    assert jnp.allclose(out_zero, jnp.zeros_like(out_zero))

    print("KERNEL_OK")
</pallas_src>

<mosaic_0001>
module attributes {stable_mosaic.version = 11 : i64} {
  func.func @_mlp_kernel_resident(%arg0: i32, %arg1: memref<16x128xbf16, #tpu.memory_space<vmem>>, %arg2: memref<128x128xbf16, #tpu.memory_space<vmem>>, %arg3: memref<128x128xbf16, #tpu.memory_space<vmem>>, %arg4: memref<16x128xf32, #tpu.memory_space<vmem>>) attributes {dimension_semantics = [#tpu.dimension_semantics<parallel>], iteration_bounds = array<i64: 1>, scalar_prefetch = 0 : i64, scratch_operands = 0 : i64, tpu.core_type = #tpu.core_type<tc>, window_params = [{transform_indices = @transform_0, window_bounds = array<i64: 16, 128>}, {pipeline_mode = #tpu.pipeline_mode<synchronous>, transform_indices = @transform_1, window_bounds = array<i64: 128, 128>}, {pipeline_mode = #tpu.pipeline_mode<synchronous>, transform_indices = @transform_2, window_bounds = array<i64: 128, 128>}, {transform_indices = @transform_3, window_bounds = array<i64: 16, 128>}]} {
    %c0 = arith.constant 0 : index
    %c0_0 = arith.constant 0 : index
    %0 = vector.load %arg1[%c0, %c0_0] : memref<16x128xbf16, #tpu.memory_space<vmem>>, vector<16x128xbf16>
    %c0_1 = arith.constant 0 : index
    %c0_2 = arith.constant 0 : index
    %1 = vector.load %arg2[%c0_1, %c0_2] : memref<128x128xbf16, #tpu.memory_space<vmem>>, vector<128x128xbf16>
    %cst = arith.constant dense<0.000000e+00> : vector<16x128xf32>
    %2 = tpu.matmul %0, %1, %cst {dimension_numbers = #tpu.dot_dimension_numbers<[1], [0], [0], [1], [0, 0, 1, 1], [], []>} : vector<16x128xbf16>, vector<128x128xbf16>, vector<16x128xf32> -> vector<16x128xf32>
    %cst_3 = arith.constant 0.000000e+00 : f32
    %3 = vector.broadcast %cst_3 : f32 to vector<16x128xf32>
    %4 = arith.maximumf %2, %3 : vector<16x128xf32>
    %5 = arith.mulf %4, %4 : vector<16x128xf32>
    %6 = arith.truncf %5 : vector<16x128xf32> to vector<16x128xbf16>
    %c0_4 = arith.constant 0 : index
    %c0_5 = arith.constant 0 : index
    %7 = vector.load %arg3[%c0_4, %c0_5] : memref<128x128xbf16, #tpu.memory_space<vmem>>, vector<128x128xbf16>
    %cst_6 = arith.constant dense<0.000000e+00> : vector<16x128xf32>
    %8 = tpu.matmul %6, %7, %cst_6 {dimension_numbers = #tpu.dot_dimension_numbers<[1], [0], [0], [1], [0, 0, 1, 1], [], []>} : vector<16x128xbf16>, vector<128x128xbf16>, vector<16x128xf32> -> vector<16x128xf32>
    %c0_7 = arith.constant 0 : index
    %c0_8 = arith.constant 0 : index
    %9 = vector.load %arg4[%c0_7, %c0_8] : memref<16x128xf32, #tpu.memory_space<vmem>>, vector<16x128xf32>
    tpu.vector_store %arg4[%c0_7, %c0_8], %8 {strides = array<i32>} : memref<16x128xf32, #tpu.memory_space<vmem>>, vector<16x128xf32>,
    return
  }
  func.func @transform_0(%arg0: i32) -> (i32, i32) {
    %c0_i32 = arith.constant 0 : i32
    %c0_i32_0 = arith.constant 0 : i32
    return %arg0, %c0_i32 : i32, i32
  }
  func.func @transform_1(%arg0: i32) -> (i32, i32) {
    %c0_i32 = arith.constant 0 : i32
    %c0_i32_0 = arith.constant 0 : i32
    %c0_i32_1 = arith.constant 0 : i32
    return %c0_i32, %c0_i32_0 : i32, i32
  }
  func.func @transform_2(%arg0: i32) -> (i32, i32) {
    %c0_i32 = arith.constant 0 : i32
    %c0_i32_0 = arith.constant 0 : i32
    %c0_i32_1 = arith.constant 0 : i32
    return %c0_i32, %c0_i32_0 : i32, i32
  }
  func.func @transform_3(%arg0: i32) -> (i32, i32) {
    %c0_i32 = arith.constant 0 : i32
    %c0_i32_0 = arith.constant 0 : i32
    return %arg0, %c0_i32 : i32, i32
  }
}

</mosaic_0001>

<llo_original>
// kernel: tpu_custom_call.1
$region0: #{tpu_custom_call.1}
  #allocation0 [shape = 'u32[]', space=smem, size = 0x4, offset = 0x4, fixed_abs, tag = 'smem constant byte address 0x4 - core index']
  #allocation1 [shape = 'u32[144,128]{1,0:T(1,128)}', space=vmem, size = 0x12000, scoped, tag = 'internal scratch']
  %s0 = inlined_call_operand.hbm [shape: bf16[16,128], index: 0, kind: input, shape index: {}]
  %s1 = inlined_call_operand.hbm [shape: bf16[128,128], index: 1, kind: input, shape index: {}]
  %s2 = inlined_call_operand.hbm [shape: bf16[128,128], index: 2, kind: input, shape index: {}]
  %s3 = inlined_call_operand.hbm [shape: f32[16,128], index: 3, kind: output, shape index: {}]
  %s4 = sld [smem:[#allocation0]]
  $region34: #{tpu_custom_call.1} parent=0
    _
  %s6 = ssub.s32 1, %s4
  %s7 = scalar_select 0, %s6, %s4
  $region1: #{tpu_custom_call.1} parent=0
    #allocation2 [shape = 'u8[4096]{0}', space=vmem, size = 0x1000, scoped, tag = 'input window, operand 0, single buffered']
    #allocation3 [shape = 's32[1]{0}', space=sflag, size = 0x4, scoped, tag = 'scoped memory for tpu_custom_call.1']
    #allocation4 [shape = 's32[1]{0}', space=sflag, size = 0x4, scoped, tag = 'scoped memory for tpu_custom_call.1']
    #allocation5 [shape = 'u8[32768]{0}', space=vmem, size = 0x8000, scoped, tag = 'input window, operand 1, single buffered']
    #allocation6 [shape = 's32[1]{0}', space=sflag, size = 0x4, scoped, tag = 'scoped memory for tpu_custom_call.1']
    #allocation7 [shape = 'u8[32768]{0}', space=vmem, size = 0x8000, scoped, tag = 'input window, operand 2, single buffered']
    #allocation8 [shape = 'u8[8192]{0}', space=vmem, size = 0x2000, scoped, tag = 'output window, operand 0, single buffered']
    %8 = vsyncpa [#allocation3], 0
    %9 = vsyncpa [#allocation6], 0
    %10 = vsyncpa [#allocation4], 0
    // Predicated region
    $region2: #{tpu_custom_call.1} parent=1 // pred_check
      _
    $region3: #{tpu_custom_call.1} parent=1 // pred_check_branch
      %12 = sbr.rel (0) target = $region5
    $region4: #{tpu_custom_call.1} parent=1 // pred_region
      %s14 = ssub.s32 128, 128
      %15 = vsyncadd [#allocation3], %s14
      %s16 = sshll.u32 [#allocation2], 4
      %s17 = int_to_ptr.vmem [resolvable:$true] %s16
      %22 = dma.hbm_to_vmem [thread:$0]  %s0, 128, %s17, [#allocation3], 64, 64, 4
    $region5: #{tpu_custom_call.1} parent=1 // pred_fallthru
      _
    // Predicated region
    $region6: #{tpu_custom_call.1} parent=1 // pred_check
      _
    $region7: #{tpu_custom_call.1} parent=1 // pred_check_branch
      %24 = sbr.rel (0) target = $region9
    $region8: #{tpu_custom_call.1} parent=1 // pred_region
      %s26 = ssub.s32 1024, 1024
      %27 = vsyncadd [#allocation6], %s26
      %s28 = sshll.u32 [#allocation5], 4
      %s29 = int_to_ptr.vmem [resolvable:$true] %s28
      %34 = dma.hbm_to_vmem [thread:$0]  %s1, 1024, %s29, [#allocation6], 64, 64, 4
    $region9: #{tpu_custom_call.1} parent=1 // pred_fallthru
      _
    // Predicated region
    $region10: #{tpu_custom_call.1} parent=1 // pred_check
      _
    $region11: #{tpu_custom_call.1} parent=1 // pred_check_branch
      %36 = sbr.rel (0) target = $region13
    $region12: #{tpu_custom_call.1} parent=1 // pred_region
      %s38 = ssub.s32 1024, 1024
      %39 = vsyncadd [#allocation6], %s38
      %s40 = sshll.u32 [#allocation7], 4
      %s41 = int_to_ptr.vmem [resolvable:$true] %s40
      %46 = dma.hbm_to_vmem [thread:$0]  %s2, 1024, %s41, [#allocation6], 64, 64, 4
    $region13: #{tpu_custom_call.1} parent=1 // pred_fallthru
      _
    // Predicated region
    $region14: #{tpu_custom_call.1} parent=1 // pred_check
      _
    $region15: #{tpu_custom_call.1} parent=1 // pred_check_branch
      %48 = sbr.rel (0) target = $region17
    $region16: #{tpu_custom_call.1} parent=1 // pred_region
      %49 = dma.done [#allocation3], 128
    $region17: #{tpu_custom_call.1} parent=1 // pred_fallthru
      _
    // Predicated region
    $region18: #{tpu_custom_call.1} parent=1 // pred_check
      _
    $region19: #{tpu_custom_call.1} parent=1 // pred_check_branch
      %51 = sbr.rel (0) target = $region21
    $region20: #{tpu_custom_call.1} parent=1 // pred_region
      %52 = dma.done [#allocation6], 1024
    $region21: #{tpu_custom_call.1} parent=1 // pred_fallthru
      _
    // Predicated region
    $region22: #{tpu_custom_call.1} parent=1 // pred_check
      _
    $region23: #{tpu_custom_call.1} parent=1 // pred_check_branch
      %54 = sbr.rel (0) target = $region25
    $region24: #{tpu_custom_call.1} parent=1 // pred_region
      %55 = dma.done [#allocation6], 1024
    $region25: #{tpu_custom_call.1} parent=1 // pred_fallthru
      _
    %v57 = vld [vmem:[#allocation2] sm:$0xf]
    %v58 = vld [vmem:[#allocation2 + $0x4] sm:$0xf]
    %v59 = vld [vmem:[#allocation5] sm:$0xf]
    %v60 = vld [vmem:[#allocation5 + $0x4] sm:$0xf]
    %v61 = vld [vmem:[#allocation5 + $0x8] sm:$0xf]
    %v62 = vld [vmem:[#allocation5 + $0xc] sm:$0xf]
    %v63 = vld [vmem:[#allocation5 + $0x10] sm:$0xf]
    %v64 = vld [vmem:[#allocation5 + $0x14] sm:$0xf]
    %v65 = vld [vmem:[#allocation5 + $0x18] sm:$0xf]
    %v66 = vld [vmem:[#allocation5 + $0x1c] sm:$0xf]
    %v67 = vld [vmem:[#allocation5 + $0x20] sm:$0xf]
    %v68 = vld [vmem:[#allocation5 + $0x24] sm:$0xf]
    %v69 = vld [vmem:[#allocation5 + $0x28] sm:$0xf]
    %v70 = vld [vmem:[#allocation5 + $0x2c] sm:$0xf]
    %v71 = vld [vmem:[#allocation5 + $0x30] sm:$0xf]
    %v72 = vld [vmem:[#allocation5 + $0x34] sm:$0xf]
    %v73 = vld [vmem:[#allocation5 + $0x38] sm:$0xf]
    %v74 = vld [vmem:[#allocation5 + $0x3c] sm:$0xf]
    %v77 = vunpack.c.l.b16 %v57
    %v78 = vunpack.c.l.b16 %v58
    %v79 = vpack.c.b16 %v78, %v77
    %v97 = vunpack.c.l.b16 %v59
    %v98 = vunpack.c.l.b16 %v60
    %v99 = vunpack.c.l.b16 %v61
    %v100 = vunpack.c.l.b16 %v62
    %v101 = vunpack.c.l.b16 %v63
    %v102 = vunpack.c.l.b16 %v64
    %v103 = vunpack.c.l.b16 %v65
    %v104 = vunpack.c.l.b16 %v66
    %v105 = vunpack.c.l.b16 %v67
    %v106 = vunpack.c.l.b16 %v68
    %v107 = vunpack.c.l.b16 %v69
    %v108 = vunpack.c.l.b16 %v70
    %v109 = vunpack.c.l.b16 %v71
    %v110 = vunpack.c.l.b16 %v72
    %v111 = vunpack.c.l.b16 %v73
    %v112 = vunpack.c.l.b16 %v74
    %v113 = vpack.c.b16 %v98, %v97
    %v114 = vpack.c.b16 %v100, %v99
    %v115 = vpack.c.b16 %v102, %v101
    %v116 = vpack.c.b16 %v104, %v103
    %v117 = vpack.c.b16 %v106, %v105
    %v118 = vpack.c.b16 %v108, %v107
    %v119 = vpack.c.b16 %v110, %v109
    %v120 = vpack.c.b16 %v112, %v111
    %129 = vmatprep.subr.bf16.mxu0 0
    %130 = vmatpush1.bf16.msra.mxu0 %v113
    %131 = vmatprep.subr.bf16.mxu0 0
    %132 = vmatpush1.bf16.msra.mxu0 %v114
    %133 = vmatprep.subr.bf16.mxu0 0
    %134 = vmatpush1.bf16.msra.mxu0 %v115
    %135 = vmatprep.subr.bf16.mxu0 0
    %136 = vmatpush1.bf16.msra.mxu0 %v116
    %137 = vmatprep.subr.bf16.mxu0 0
    %138 = vmatpush1.bf16.msra.mxu0 %v117
    %139 = vmatprep.subr.bf16.mxu0 0
    %140 = vmatpush1.bf16.msra.mxu0 %v118
    %141 = vmatprep.subr.bf16.mxu0 0
    %142 = vmatpush1.bf16.msra.mxu0 %v119
    %143 = vmatprep.subr.bf16.mxu0 0
    %144 = vmatpush1.bf16.msra.mxu0 %v120
    %145 = vmatprep.subr.bf16.mxu0 0
    %146 = vmatpush1.bf16.msra.mxu0 0
    %147 = vmatprep.subr.bf16.mxu0 0
    %148 = vmatpush1.bf16.msra.mxu0 0
    %149 = vmatprep.subr.bf16.mxu0 0
    %150 = vmatpush1.bf16.msra.mxu0 0
    %151 = vmatprep.subr.bf16.mxu0 0
    %152 = vmatpush1.bf16.msra.mxu0 0
    %153 = vmatprep.subr.bf16.mxu0 0
    %154 = vmatpush1.bf16.msra.mxu0 0
    %155 = vmatprep.subr.bf16.mxu0 0
    %156 = vmatpush1.bf16.msra.mxu0 0
    %157 = vmatprep.subr.bf16.mxu0 0
    %158 = vmatpush1.bf16.msra.mxu0 0
    %159 = vmatprep.subr.bf16.mxu0 0
    %160 = vmatpush1.bf16.msra.mxu0 0
    %161 = vmatprep.mubr.bf16.mxu0 0
    %162 = vmatmul.mubr.bf16.gmra.mrb[0].mxu0 %v79
    %v163 = vpop.f32.mrb[0].mxu0
    %v164 = vadd.f32 0.0, %v163
    %v165 = vpop.f32.mrb[0].mxu0
    %v166 = vpop.f32.mrb[0].mxu0
    %v167 = vadd.f32 0.0, %v166
    %v168 = vpop.f32.mrb[0].mxu0
    %169 = vdwg.mxu0
    %v170 = vmax.f32 %v164, 0.0
    %v171 = vmax.f32 %v167, 0.0
    %v172 = vmul.f32 %v170, %v170
    %v173 = vmul.f32 %v171, %v171
    %v174 = vpack.c.bf16 %v173, %v172
    %v175 = vld [vmem:[#allocation7] sm:$0xf]
    %v176 = vld [vmem:[#allocation7 + $0x4] sm:$0xf]
    %v177 = vld [vmem:[#allocation7 + $0x8] sm:$0xf]
    %v178 = vld [vmem:[#allocation7 + $0xc] sm:$0xf]
    %v179 = vld [vmem:[#allocation7 + $0x10] sm:$0xf]
    %v180 = vld [vmem:[#allocation7 + $0x14] sm:$0xf]
    %v181 = vld [vmem:[#allocation7 + $0x18] sm:$0xf]
    %v182 = vld [vmem:[#allocation7 + $0x1c] sm:$0xf]
    %v183 = vld [vmem:[#allocation7 + $0x20] sm:$0xf]
    %v184 = vld [vmem:[#allocation7 + $0x24] sm:$0xf]
    %v185 = vld [vmem:[#allocation7 + $0x28] sm:$0xf]
    %v186 = vld [vmem:[#allocation7 + $0x2c] sm:$0xf]
    %v187 = vld [vmem:[#allocation7 + $0x30] sm:$0xf]
    %v188 = vld [vmem:[#allocation7 + $0x34] sm:$0xf]
    %v189 = vld [vmem:[#allocation7 + $0x38] sm:$0xf]
    %v190 = vld [vmem:[#allocation7 + $0x3c] sm:$0xf]
    %v207 = vunpack.c.l.b16 %v175
    %v208 = vunpack.c.l.b16 %v176
    %v209 = vunpack.c.l.b16 %v177
    %v210 = vunpack.c.l.b16 %v178
    %v211 = vunpack.c.l.b16 %v179
    %v212 = vunpack.c.l.b16 %v180
    %v213 = vunpack.c.l.b16 %v181
    %v214 = vunpack.c.l.b16 %v182
    %v215 = vunpack.c.l.b16 %v183
    %v216 = vunpack.c.l.b16 %v184
    %v217 = vunpack.c.l.b16 %v185
    %v218 = vunpack.c.l.b16 %v186
    %v219 = vunpack.c.l.b16 %v187
    %v220 = vunpack.c.l.b16 %v188
    %v221 = vunpack.c.l.b16 %v189
    %v222 = vunpack.c.l.b16 %v190
    %v223 = vpack.c.b16 %v208, %v207
    %v224 = vpack.c.b16 %v210, %v209
    %v225 = vpack.c.b16 %v212, %v211
    %v226 = vpack.c.b16 %v214, %v213
    %v227 = vpack.c.b16 %v216, %v215
    %v228 = vpack.c.b16 %v218, %v217
    %v229 = vpack.c.b16 %v220, %v219
    %v230 = vpack.c.b16 %v222, %v221
    %239 = vmatprep.subr.bf16.mxu0 0
    %240 = vmatpush1.bf16.msra.mxu0 %v223
    %241 = vmatprep.subr.bf16.mxu0 0
    %242 = vmatpush1.bf16.msra.mxu0 %v224
    %243 = vmatprep.subr.bf16.mxu0 0
    %244 = vmatpush1.bf16.msra.mxu0 %v225
    %245 = vmatprep.subr.bf16.mxu0 0
    %246 = vmatpush1.bf16.msra.mxu0 %v226
    %247 = vmatprep.subr.bf16.mxu0 0
    %248 = vmatpush1.bf16.msra.mxu0 %v227
    %249 = vmatprep.subr.bf16.mxu0 0
    %250 = vmatpush1.bf16.msra.mxu0 %v228
    %251 = vmatprep.subr.bf16.mxu0 0
    %252 = vmatpush1.bf16.msra.mxu0 %v229
    %253 = vmatprep.subr.bf16.mxu0 0
    %254 = vmatpush1.bf16.msra.mxu0 %v230
    %255 = vmatprep.subr.bf16.mxu0 0
    %256 = vmatpush1.bf16.msra.mxu0 0
    %257 = vmatprep.subr.bf16.mxu0 0
    %258 = vmatpush1.bf16.msra.mxu0 0
    %259 = vmatprep.subr.bf16.mxu0 0
    %260 = vmatpush1.bf16.msra.mxu0 0
    %261 = vmatprep.subr.bf16.mxu0 0
    %262 = vmatpush1.bf16.msra.mxu0 0
    %263 = vmatprep.subr.bf16.mxu0 0
    %264 = vmatpush1.bf16.msra.mxu0 0
    %265 = vmatprep.subr.bf16.mxu0 0
    %266 = vmatpush1.bf16.msra.mxu0 0
    %267 = vmatprep.subr.bf16.mxu0 0
    %268 = vmatpush1.bf16.msra.mxu0 0
    %269 = vmatprep.subr.bf16.mxu0 0
    %270 = vmatpush1.bf16.msra.mxu0 0
    %271 = vmatprep.mubr.bf16.mxu0 0
    %272 = vmatmul.mubr.bf16.gmra.mrb[0].mxu0 %v174
    %v273 = vpop.f32.mrb[0].mxu0
    %v274 = vadd.f32 0.0, %v273
    %v275 = vpop.f32.mrb[0].mxu0
    %v276 = vpop.f32.mrb[0].mxu0
    %v277 = vadd.f32 0.0, %v276
    %v278 = vpop.f32.mrb[0].mxu0
    %279 = vdwg.mxu0
    %280 = vst [vmem:[#allocation8] sm:$0xff] %v274
    %281 = vst [vmem:[#allocation8 + $0x8] sm:$0xff] %v277
    // Predicated region
    $region26: #{tpu_custom_call.1} parent=1 // pred_check
      _
    $region27: #{tpu_custom_call.1} parent=1 // pred_check_branch
      %283 = sbr.rel (0) target = $region29
    $region28: #{tpu_custom_call.1} parent=1 // pred_region
      %s285 = ssub.s32 256, 256
      %286 = vsyncadd [#allocation4], %s285
      %s287 = sshll.u32 [#allocation8], 4
      %s288 = int_to_ptr.vmem [resolvable:$true] %s287
      %293 = dma.vmem_to_hbm [thread:$0]  %s288, 256, %s3, [#allocation4], 128, 128, 8
    $region29: #{tpu_custom_call.1} parent=1 // pred_fallthru
      _
    // Predicated region
    $region30: #{tpu_custom_call.1} parent=1 // pred_check
      _
    $region31: #{tpu_custom_call.1} parent=1 // pred_check_branch
      %295 = sbr.rel (0) target = $region33
    $region32: #{tpu_custom_call.1} parent=1 // pred_region
      %296 = dma.done [#allocation4], 256
    $region33: #{tpu_custom_call.1} parent=1 // pred_fallthru
      _
    %297 = vsyncpa [#allocation3], 1
    %298 = vsyncpa [#allocation6], 1
    %299 = vsyncpa [#allocation4], 1

</llo_original>
